<compile_context>
chip_gen: v5e
topology: v5e:2x2
jax: 0.10.0
libtpu: 0.0.40
codegen_flags: <defaults>
</compile_context>

<pallas_src>
import jax
import jax.numpy as jnp
from jax.experimental import pallas as pl
from jax.experimental.pallas import tpu as pltpu


def _round_up(x, m):
    return ((x + m - 1) // m) * m


def _pick_row_tile(n_rows):
    # Largest row (sublane) tile whose padding waste stays under ~12.5% of the
    # rows (8 is always allowed; its waste is at most 7 rows).
    for c in (1024, 512, 256, 128, 64, 32, 16, 8):
        if _round_up(n_rows, c) - n_rows <= max(n_rows // 8, 7):
            return c
    return 8


def _pick_spatial_tile(hw):
    # Largest lane tile (multiple of 128) whose padding waste stays under
    # ~12.5% of H*W (128 always qualifies; its waste is at most 127 elements).
    for c in (2048, 1024, 512, 256, 128):
        if _round_up(hw, c) - hw <= max(hw // 8, 127):
            return c
    return 128


# ---------- Fast path (H*W == 1): plain row matmul, single Cout tile ----------

def _rows_matmul_kernel(x_ref, w_ref, b_ref, o_ref):
    # (tm, cin_pad) x (cin_pad, cout_pad) on the MXU, f32 accumulation,
    # bias add on the VPU, lane-dense (multiple of 128) output store.
    acc = jnp.dot(x_ref[...], w_ref[...], preferred_element_type=jnp.float32)
    o_ref[...] = (acc + b_ref[...]).astype(o_ref.dtype)


def _conv1x1_pointwise(x_nchw, weight_oihw, bias):
    N, Cin, H, W = x_nchw.shape
    Cout = weight_oihw.shape[0]

    cin_pad = _round_up(Cin, 8)        # 28 -> 32: sublane-clean contraction dim
    cout_pad = _round_up(Cout, 128)    # 672 -> 768: lane-dense output
    tm = _pick_row_tile(N)             # N=1 -> tm=8, m_pad=8, grid=(1,)
    m_pad = _round_up(N, tm)

    x_rows = x_nchw.reshape(N, Cin)                          # metadata-only (H=W=1)
    x_rows = jnp.pad(x_rows, ((0, m_pad - N), (0, cin_pad - Cin)))
    w_t = jnp.pad(weight_oihw.reshape(Cout, Cin).T,
                  ((0, cin_pad - Cin), (0, cout_pad - Cout)))  # (cin_pad, cout_pad)
    b_row = jnp.pad(bias.reshape(1, Cout), ((0, 0), (0, cout_pad - Cout)))

    grid = (m_pad // tm,)

    out = pl.pallas_call(
        _rows_matmul_kernel,
        out_shape=jax.ShapeDtypeStruct((m_pad, cout_pad), x_nchw.dtype),
        grid_spec=pltpu.PrefetchScalarGridSpec(
            num_scalar_prefetch=0,
            grid=grid,
            in_specs=[
                pl.BlockSpec((tm, cin_pad), lambda i: (i, 0)),
                pl.BlockSpec((cin_pad, cout_pad), lambda i: (0, 0)),  # resident
                pl.BlockSpec((1, cout_pad), lambda i: (0, 0)),        # resident
            ],
            out_specs=pl.BlockSpec((tm, cout_pad), lambda i: (i, 0)),
        ),
        compiler_params=pltpu.CompilerParams(
            dimension_semantics=("parallel",),
        ),
    )(x_rows, w_t, b_row)

    return out[:N, :Cout].reshape(N, Cout, H, W)


# ---------- General path (H*W > 1): NCHW-native matmul, no transposes ---------

def _nchw_matmul_kernel(x_ref, w_ref, b_ref, o_ref):
    # x_ref: (1, cin_pad, ts), w_ref: (cout_pad, cin_pad), b_ref: (cout_pad, 1)
    # o_ref: (1, cout_pad, ts) -- Cout on sublanes, spatial on lanes (NCHW-native).
    acc = jnp.dot(w_ref[...], x_ref[0], preferred_element_type=jnp.float32)
    o_ref[0] = (acc + b_ref[...]).astype(o_ref.dtype)


def _conv1x1_nchw(x_nchw, weight_oihw, bias):
    N, Cin, H, W = x_nchw.shape
    Cout = weight_oihw.shape[0]
    HW = H * W

    cin_pad = _round_up(Cin, 8)        # 28 -> 32
    cout_pad = _round_up(Cout, 8)      # sublane dim of the output (672 is clean)
    ts = _pick_spatial_tile(HW)
    hw_pad = _round_up(HW, ts)
    # v7x: with a single batch and a single spatial tile, split it in two so the
    # "parallel" grid axis can shard across both TensorCores (free elsewhere).
    if N == 1 and hw_pad == ts and ts % 256 == 0:
        ts //= 2

    x_mat = x_nchw.reshape(N, Cin, HW)                        # reshape only
    x_mat = jnp.pad(x_mat, ((0, 0), (0, cin_pad - Cin), (0, hw_pad - HW)))
    w_mat = jnp.pad(weight_oihw.reshape(Cout, Cin),
                    ((0, cout_pad - Cout), (0, cin_pad - Cin)))
    b_col = jnp.pad(bias.reshape(Cout, 1), ((0, cout_pad - Cout), (0, 0)))

    grid = (N, hw_pad // ts)

    # VMEM per step (double-buffered): ~2*(cout_pad*ts + cin_pad*ts)*4B plus the
    # resident weight/bias -- a few MiB at ts<=2048, well under the 32 MiB default.
    out = pl.pallas_call(
        _nchw_matmul_kernel,
        out_shape=jax.ShapeDtypeStruct((N, cout_pad, hw_pad), x_nchw.dtype),
        grid_spec=pltpu.PrefetchScalarGridSpec(
            num_scalar_prefetch=0,
            grid=grid,
            in_specs=[
                pl.BlockSpec((1, cin_pad, ts), lambda n, s: (n, 0, s)),
                pl.BlockSpec((cout_pad, cin_pad), lambda n, s: (0, 0)),  # resident
                pl.BlockSpec((cout_pad, 1), lambda n, s: (0, 0)),        # resident
            ],
            out_specs=pl.BlockSpec((1, cout_pad, ts), lambda n, s: (n, 0, s)),
        ),
        compiler_params=pltpu.CompilerParams(
            dimension_semantics=("parallel", "parallel"),
        ),
    )(x_mat, w_mat, b_col)

    return out[:, :Cout, :HW].reshape(N, Cout, H, W)


def conv2d_1x1(x_nchw, weight_oihw, bias):
    """1x1 Conv2d, stride 1, no padding. x: (N, Cin, H, W) -> (N, Cout, H, W)."""
    if x_nchw.shape[2] * x_nchw.shape[3] == 1:
        return _conv1x1_pointwise(x_nchw, weight_oihw, bias)
    return _conv1x1_nchw(x_nchw, weight_oihw, bias)


if __name__ == "__main__":
    key = jax.random.PRNGKey(0)
    k_x, k_w, k_b = jax.random.split(key, 3)

    # Shapes implied by the PyTorch module: Conv2d(28, 672, k=1) on (1, 28, 1, 1).
    N, Cin, Cout, H, W = 1, 28, 672, 1, 1
    x = jax.random.normal(k_x, (N, Cin, H, W), dtype=jnp.float32)
    weight = jax.random.normal(k_w, (Cout, Cin, 1, 1), dtype=jnp.float32) * 0.05
    bias = jax.random.normal(k_b, (Cout,), dtype=jnp.float32) * 0.05

    def ref_conv(xv):
        return (jnp.einsum("nihw,oi->nohw", xv, weight.reshape(Cout, Cin))
                + bias.reshape(1, Cout, 1, 1))

    # Module's exact shape: fast path, single grid step.
    out = conv2d_1x1(x, weight, bias)
    jax.block_until_ready(out)
    assert out.shape == (N, Cout, H, W), out.shape
    assert jnp.allclose(out, ref_conv(x), atol=1e-4, rtol=1e-4)

    # General NCHW-native path: multi-batch, tile-divisible spatial extent.
    x2 = jax.random.normal(k_x, (2, Cin, 16, 16), dtype=jnp.float32)
    out2 = conv2d_1x1(x2, weight, bias)
    jax.block_until_ready(out2)
    assert out2.shape == (2, Cout, 16, 16), out2.shape
    assert jnp.allclose(out2, ref_conv(x2), atol=1e-4, rtol=1e-4)

    # General path with spatial padding (H*W = 63 -> 128 lanes).
    x3 = jax.random.normal(k_x, (1, Cin, 7, 9), dtype=jnp.float32)
    out3 = conv2d_1x1(x3, weight, bias)
    jax.block_until_ready(out3)
    assert out3.shape == (1, Cout, 7, 9), out3.shape
    assert jnp.allclose(out3, ref_conv(x3), atol=1e-4, rtol=1e-4)

    print("KERNEL_OK")
</pallas_src>

<mosaic_0001>
module attributes {stable_mosaic.version = 11 : i64} {
  func.func @_rows_matmul_kernel(%arg0: i32, %arg1: memref<8x32xf32, #tpu.memory_space<vmem>>, %arg2: memref<32x768xf32, #tpu.memory_space<vmem>>, %arg3: memref<1x768xf32, #tpu.memory_space<vmem>>, %arg4: memref<8x768xf32, #tpu.memory_space<vmem>>) attributes {dimension_semantics = [#tpu.dimension_semantics<parallel>], iteration_bounds = array<i64: 1>, scalar_prefetch = 0 : i64, scratch_operands = 0 : i64, tpu.core_type = #tpu.core_type<tc>, window_params = [{transform_indices = @transform_0, window_bounds = array<i64: 8, 32>}, {pipeline_mode = #tpu.pipeline_mode<synchronous>, transform_indices = @transform_1, window_bounds = array<i64: 32, 768>}, {pipeline_mode = #tpu.pipeline_mode<synchronous>, transform_indices = @transform_2, window_bounds = array<i64: 1, 768>}, {transform_indices = @transform_3, window_bounds = array<i64: 8, 768>}]} {
    %c0 = arith.constant 0 : index
    %c0_0 = arith.constant 0 : index
    %0 = vector.load %arg1[%c0, %c0_0] : memref<8x32xf32, #tpu.memory_space<vmem>>, vector<8x32xf32>
    %c0_1 = arith.constant 0 : index
    %c0_2 = arith.constant 0 : index
    %1 = vector.load %arg2[%c0_1, %c0_2] : memref<32x768xf32, #tpu.memory_space<vmem>>, vector<32x768xf32>
    %cst = arith.constant dense<0.000000e+00> : vector<8x768xf32>
    %2 = tpu.matmul %0, %1, %cst {dimension_numbers = #tpu.dot_dimension_numbers<[1], [0], [0], [1], [0, 0, 1, 1], [], []>} : vector<8x32xf32>, vector<32x768xf32>, vector<8x768xf32> -> vector<8x768xf32>
    %c0_3 = arith.constant 0 : index
    %c0_4 = arith.constant 0 : index
    %3 = vector.load %arg3[%c0_3, %c0_4] : memref<1x768xf32, #tpu.memory_space<vmem>>, vector<1x768xf32>
    %4 = vector.broadcast %3 : vector<1x768xf32> to vector<8x768xf32>
    %5 = arith.addf %2, %4 : vector<8x768xf32>
    %c0_5 = arith.constant 0 : index
    %c0_6 = arith.constant 0 : index
    %6 = vector.load %arg4[%c0_5, %c0_6] : memref<8x768xf32, #tpu.memory_space<vmem>>, vector<8x768xf32>
    tpu.vector_store %arg4[%c0_5, %c0_6], %5 {strides = array<i32>} : memref<8x768xf32, #tpu.memory_space<vmem>>, vector<8x768xf32>,
    return
  }
  func.func @transform_0(%arg0: i32) -> (i32, i32) {
    %c0_i32 = arith.constant 0 : i32
    %c0_i32_0 = arith.constant 0 : i32
    return %arg0, %c0_i32 : i32, i32
  }
  func.func @transform_1(%arg0: i32) -> (i32, i32) {
    %c0_i32 = arith.constant 0 : i32
    %c0_i32_0 = arith.constant 0 : i32
    %c0_i32_1 = arith.constant 0 : i32
    return %c0_i32, %c0_i32_0 : i32, i32
  }
  func.func @transform_2(%arg0: i32) -> (i32, i32) {
    %c0_i32 = arith.constant 0 : i32
    %c0_i32_0 = arith.constant 0 : i32
    %c0_i32_1 = arith.constant 0 : i32
    return %c0_i32, %c0_i32_0 : i32, i32
  }
  func.func @transform_3(%arg0: i32) -> (i32, i32) {
    %c0_i32 = arith.constant 0 : i32
    %c0_i32_0 = arith.constant 0 : i32
    return %arg0, %c0_i32 : i32, i32
  }
}

</mosaic_0001>

<llo_original>
// kernel: tpu_custom_call.1
$region0: #{tpu_custom_call.1}
  #allocation0 [shape = 'u32[]', space=smem, size = 0x4, offset = 0x4, fixed_abs, tag = 'smem constant byte address 0x4 - core index']
  #allocation1 [shape = 'u32[72,128]{1,0:T(1,128)}', space=vmem, size = 0x9000, scoped, tag = 'internal scratch']
  %s0 = inlined_call_operand.hbm [shape: f32[8,32], index: 0, kind: input, shape index: {}]
  %s1 = inlined_call_operand.hbm [shape: f32[32,768], index: 1, kind: input, shape index: {}]
  %s2 = inlined_call_operand.hbm [shape: f32[1,768], index: 2, kind: input, shape index: {}]
  %s3 = inlined_call_operand.hbm [shape: f32[8,768], index: 3, kind: output, shape index: {}]
  %s4 = sld [smem:[#allocation0]]
  $region34: #{tpu_custom_call.1} parent=0
    _
  %s6 = ssub.s32 1, %s4
  %s7 = scalar_select 0, %s6, %s4
  $region1: #{tpu_custom_call.1} parent=0
    #allocation2 [shape = 'u8[4096]{0}', space=vmem, size = 0x1000, scoped, tag = 'input window, operand 0, single buffered']
    #allocation3 [shape = 's32[1]{0}', space=sflag, size = 0x4, scoped, tag = 'scoped memory for tpu_custom_call.1']
    #allocation4 [shape = 's32[1]{0}', space=sflag, size = 0x4, scoped, tag = 'scoped memory for tpu_custom_call.1']
    #allocation5 [shape = 'u8[98304]{0}', space=vmem, size = 0x18000, scoped, tag = 'input window, operand 1, single buffered']
    #allocation6 [shape = 's32[1]{0}', space=sflag, size = 0x4, scoped, tag = 'scoped memory for tpu_custom_call.1']
    #allocation7 [shape = 'u8[3072]{0}', space=vmem, size = 0xc00, scoped, tag = 'input window, operand 2, single buffered']
    #allocation8 [shape = 'u8[24576]{0}', space=vmem, size = 0x6000, scoped, tag = 'output window, operand 0, single buffered']
    %8 = vsyncpa [#allocation3], 0
    %9 = vsyncpa [#allocation6], 0
    %10 = vsyncpa [#allocation4], 0
    // Predicated region
    $region2: #{tpu_custom_call.1} parent=1 // pred_check
      _
    $region3: #{tpu_custom_call.1} parent=1 // pred_check_branch
      %12 = sbr.rel (0) target = $region5
    $region4: #{tpu_custom_call.1} parent=1 // pred_region
      %14 = vsyncadd [#allocation3], 0
      %s16 = sshll.u32 %s0, 4
      %s17 = int_to_ptr.hbm [resolvable:$true] %s16
      %s18 = sshll.u32 [#allocation2], 4
      %s19 = int_to_ptr.vmem [resolvable:$true] %s18
      %21 = dma.hbm_to_vmem [thread:$0]  %s17, 128, %s19, [#allocation3]
    $region5: #{tpu_custom_call.1} parent=1 // pred_fallthru
      _
    // Predicated region
    $region6: #{tpu_custom_call.1} parent=1 // pred_check
      _
    $region7: #{tpu_custom_call.1} parent=1 // pred_check_branch
      %23 = sbr.rel (0) target = $region9
    $region8: #{tpu_custom_call.1} parent=1 // pred_region
      %25 = vsyncadd [#allocation6], 0
      %s26 = sshll.u32 %s1, 4
      %s27 = int_to_ptr.hbm [resolvable:$true] %s26
      %s28 = sshll.u32 [#allocation5], 4
      %s29 = int_to_ptr.vmem [resolvable:$true] %s28
      %34 = dma.hbm_to_vmem [thread:$0]  %s27, 3072, %s29, [#allocation6], 768, 768, 48
    $region9: #{tpu_custom_call.1} parent=1 // pred_fallthru
      _
    // Predicated region
    $region10: #{tpu_custom_call.1} parent=1 // pred_check
      _
    $region11: #{tpu_custom_call.1} parent=1 // pred_check_branch
      %36 = sbr.rel (0) target = $region13
    $region12: #{tpu_custom_call.1} parent=1 // pred_region
      %38 = vsyncadd [#allocation6], 0
      %s40 = sshll.u32 %s2, 4
      %s41 = int_to_ptr.hbm [resolvable:$true] %s40
      %s42 = sshll.u32 [#allocation7], 4
      %s43 = int_to_ptr.vmem [resolvable:$true] %s42
      %45 = dma.hbm_to_vmem [thread:$0]  %s41, 96, %s43, [#allocation6]
    $region13: #{tpu_custom_call.1} parent=1 // pred_fallthru
      _
    // Predicated region
    $region14: #{tpu_custom_call.1} parent=1 // pred_check
      _
    $region15: #{tpu_custom_call.1} parent=1 // pred_check_branch
      %47 = sbr.rel (0) target = $region17
    $region16: #{tpu_custom_call.1} parent=1 // pred_region
      %49 = dma.done [#allocation3], 128
    $region17: #{tpu_custom_call.1} parent=1 // pred_fallthru
      _
    // Predicated region
    $region18: #{tpu_custom_call.1} parent=1 // pred_check
      _
    $region19: #{tpu_custom_call.1} parent=1 // pred_check_branch
      %51 = sbr.rel (0) target = $region21
    $region20: #{tpu_custom_call.1} parent=1 // pred_region
      %53 = dma.done [#allocation6], 3072
    $region21: #{tpu_custom_call.1} parent=1 // pred_fallthru
      _
    // Predicated region
    $region22: #{tpu_custom_call.1} parent=1 // pred_check
      _
    $region23: #{tpu_custom_call.1} parent=1 // pred_check_branch
      %55 = sbr.rel (0) target = $region25
    $region24: #{tpu_custom_call.1} parent=1 // pred_region
      %57 = dma.done [#allocation6], 96
    $region25: #{tpu_custom_call.1} parent=1 // pred_fallthru
      _
    %v58 = vld [vmem:[#allocation2] sm:$0xff]
    %v59 = vld [vmem:[#allocation5] sm:$0xff]
    %v60 = vld [vmem:[#allocation5 + $0x8] sm:$0xff]
    %v61 = vld [vmem:[#allocation5 + $0x10] sm:$0xff]
    %v62 = vld [vmem:[#allocation5 + $0x18] sm:$0xff]
    %v63 = vld [vmem:[#allocation5 + $0x20] sm:$0xff]
    %v64 = vld [vmem:[#allocation5 + $0x28] sm:$0xff]
    %v65 = vld [vmem:[#allocation5 + $0x30] sm:$0xff]
    %v66 = vld [vmem:[#allocation5 + $0x38] sm:$0xff]
    %v67 = vld [vmem:[#allocation5 + $0x40] sm:$0xff]
    %v68 = vld [vmem:[#allocation5 + $0x48] sm:$0xff]
    %v69 = vld [vmem:[#allocation5 + $0x50] sm:$0xff]
    %v70 = vld [vmem:[#allocation5 + $0x58] sm:$0xff]
    %v71 = vld [vmem:[#allocation5 + $0x60] sm:$0xff]
    %v72 = vld [vmem:[#allocation5 + $0x68] sm:$0xff]
    %v73 = vld [vmem:[#allocation5 + $0x70] sm:$0xff]
    %v74 = vld [vmem:[#allocation5 + $0x78] sm:$0xff]
    %v75 = vld [vmem:[#allocation5 + $0x80] sm:$0xff]
    %v76 = vld [vmem:[#allocation5 + $0x88] sm:$0xff]
    %v77 = vld [vmem:[#allocation5 + $0x90] sm:$0xff]
    %v78 = vld [vmem:[#allocation5 + $0x98] sm:$0xff]
    %v79 = vld [vmem:[#allocation5 + $0xa0] sm:$0xff]
    %v80 = vld [vmem:[#allocation5 + $0xa8] sm:$0xff]
    %v81 = vld [vmem:[#allocation5 + $0xb0] sm:$0xff]
    %v82 = vld [vmem:[#allocation5 + $0xb8] sm:$0xff]
    %v83 = vld [vmem:[#allocation7] sm:$0x3f]
    %v85 = vperm.slane %v83, 0
    %v86 = vperm.slane %v83, 1
    %v87 = vperm.slane %v83, 2
    %v88 = vperm.slane %v83, 3
    %v89 = vperm.slane %v83, 4
    %v90 = vperm.slane %v83, 5
    %vm97 = vcmask 261120
    %v99 = vsel %vm97, %v58, 0
    %101 = vmatpush.msra.mxu0 0.0
    %102 = vmatpush.msra.mxu0 0.0
    %103 = vmatpush.msra.mxu0 0.0
    %104 = vmatpush.msra.mxu0 0.0
    %105 = vmatpush.msra.mxu0 0.0
    %106 = vmatpush.msra.mxu0 0.0
    %107 = vmatpush.msra.mxu0 0.0
    %108 = vmatpush.msra.mxu0 0.0
    %109 = vmatpush.msra.mxu0 0.0
    %110 = vmatpush.msra.mxu0 0.0
    %111 = vmatpush.msra.mxu0 0.0
    %112 = vmatpush.msra.mxu0 0.0
    %113 = vmatpush.msra.mxu0 %v77
    %114 = vmatpush.msra.mxu0 %v71
    %115 = vmatpush.msra.mxu0 %v65
    %116 = vmatpush.msra.mxu0 %v59
    %117 = vmatmul.f32.gmra.mxu0 %v99
    %v118 = vpop.f32.mrf.mxu0
    %v119 = vadd.f32 %v85, %v118
    %120 = vdwg.mxu0
    %121 = vmatpush.msra.mxu0 0.0
    %122 = vmatpush.msra.mxu0 0.0
    %123 = vmatpush.msra.mxu0 0.0
    %124 = vmatpush.msra.mxu0 0.0
    %125 = vmatpush.msra.mxu0 0.0
    %126 = vmatpush.msra.mxu0 0.0
    %127 = vmatpush.msra.mxu0 0.0
    %128 = vmatpush.msra.mxu0 0.0
    %129 = vmatpush.msra.mxu0 0.0
    %130 = vmatpush.msra.mxu0 0.0
    %131 = vmatpush.msra.mxu0 0.0
    %132 = vmatpush.msra.mxu0 0.0
    %133 = vmatpush.msra.mxu0 %v78
    %134 = vmatpush.msra.mxu0 %v72
    %135 = vmatpush.msra.mxu0 %v66
    %136 = vmatpush.msra.mxu0 %v60
    %137 = vmatmul.f32.gmra.mxu0 %v99
    %v138 = vpop.f32.mrf.mxu0
    %v139 = vadd.f32 %v86, %v138
    %140 = vdwg.mxu0
    %141 = vmatpush.msra.mxu0 0.0
    %142 = vmatpush.msra.mxu0 0.0
    %143 = vmatpush.msra.mxu0 0.0
    %144 = vmatpush.msra.mxu0 0.0
    %145 = vmatpush.msra.mxu0 0.0
    %146 = vmatpush.msra.mxu0 0.0
    %147 = vmatpush.msra.mxu0 0.0
    %148 = vmatpush.msra.mxu0 0.0
    %149 = vmatpush.msra.mxu0 0.0
    %150 = vmatpush.msra.mxu0 0.0
    %151 = vmatpush.msra.mxu0 0.0
    %152 = vmatpush.msra.mxu0 0.0
    %153 = vmatpush.msra.mxu0 %v79
    %154 = vmatpush.msra.mxu0 %v73
    %155 = vmatpush.msra.mxu0 %v67
    %156 = vmatpush.msra.mxu0 %v61
    %157 = vmatmul.f32.gmra.mxu0 %v99
    %v158 = vpop.f32.mrf.mxu0
    %v159 = vadd.f32 %v87, %v158
    %160 = vdwg.mxu0
    %161 = vmatpush.msra.mxu0 0.0
    %162 = vmatpush.msra.mxu0 0.0
    %163 = vmatpush.msra.mxu0 0.0
    %164 = vmatpush.msra.mxu0 0.0
    %165 = vmatpush.msra.mxu0 0.0
    %166 = vmatpush.msra.mxu0 0.0
    %167 = vmatpush.msra.mxu0 0.0
    %168 = vmatpush.msra.mxu0 0.0
    %169 = vmatpush.msra.mxu0 0.0
    %170 = vmatpush.msra.mxu0 0.0
    %171 = vmatpush.msra.mxu0 0.0
    %172 = vmatpush.msra.mxu0 0.0
    %173 = vmatpush.msra.mxu0 %v80
    %174 = vmatpush.msra.mxu0 %v74
    %175 = vmatpush.msra.mxu0 %v68
    %176 = vmatpush.msra.mxu0 %v62
    %177 = vmatmul.f32.gmra.mxu0 %v99
    %v178 = vpop.f32.mrf.mxu0
    %v179 = vadd.f32 %v88, %v178
    %180 = vdwg.mxu0
    %181 = vmatpush.msra.mxu0 0.0
    %182 = vmatpush.msra.mxu0 0.0
    %183 = vmatpush.msra.mxu0 0.0
    %184 = vmatpush.msra.mxu0 0.0
    %185 = vmatpush.msra.mxu0 0.0
    %186 = vmatpush.msra.mxu0 0.0
    %187 = vmatpush.msra.mxu0 0.0
    %188 = vmatpush.msra.mxu0 0.0
    %189 = vmatpush.msra.mxu0 0.0
    %190 = vmatpush.msra.mxu0 0.0
    %191 = vmatpush.msra.mxu0 0.0
    %192 = vmatpush.msra.mxu0 0.0
    %193 = vmatpush.msra.mxu0 %v81
    %194 = vmatpush.msra.mxu0 %v75
    %195 = vmatpush.msra.mxu0 %v69
    %196 = vmatpush.msra.mxu0 %v63
    %197 = vmatmul.f32.gmra.mxu0 %v99
    %v198 = vpop.f32.mrf.mxu0
    %v199 = vadd.f32 %v89, %v198
    %200 = vdwg.mxu0
    %201 = vmatpush.msra.mxu0 0.0
    %202 = vmatpush.msra.mxu0 0.0
    %203 = vmatpush.msra.mxu0 0.0
    %204 = vmatpush.msra.mxu0 0.0
    %205 = vmatpush.msra.mxu0 0.0
    %206 = vmatpush.msra.mxu0 0.0
    %207 = vmatpush.msra.mxu0 0.0
    %208 = vmatpush.msra.mxu0 0.0
    %209 = vmatpush.msra.mxu0 0.0
    %210 = vmatpush.msra.mxu0 0.0
    %211 = vmatpush.msra.mxu0 0.0
    %212 = vmatpush.msra.mxu0 0.0
    %213 = vmatpush.msra.mxu0 %v82
    %214 = vmatpush.msra.mxu0 %v76
    %215 = vmatpush.msra.mxu0 %v70
    %216 = vmatpush.msra.mxu0 %v64
    %217 = vmatmul.f32.gmra.mxu0 %v99
    %v218 = vpop.f32.mrf.mxu0
    %v219 = vadd.f32 %v90, %v218
    %220 = vdwg.mxu0
    %221 = vst [vmem:[#allocation8] sm:$0xff] %v119
    %222 = vst [vmem:[#allocation8 + $0x8] sm:$0xff] %v139
    %223 = vst [vmem:[#allocation8 + $0x10] sm:$0xff] %v159
    %224 = vst [vmem:[#allocation8 + $0x18] sm:$0xff] %v179
    %225 = vst [vmem:[#allocation8 + $0x20] sm:$0xff] %v199
    %226 = vst [vmem:[#allocation8 + $0x28] sm:$0xff] %v219
    // Predicated region
    $region26: #{tpu_custom_call.1} parent=1 // pred_check
      _
    $region27: #{tpu_custom_call.1} parent=1 // pred_check_branch
      %228 = sbr.rel (0) target = $region29
    $region28: #{tpu_custom_call.1} parent=1 // pred_region
      %230 = vsyncadd [#allocation4], 0
      %s232 = sshll.u32 [#allocation8], 4
      %s233 = int_to_ptr.vmem [resolvable:$true] %s232
      %s234 = sshll.u32 %s3, 4
      %s235 = int_to_ptr.hbm [resolvable:$true] %s234
      %237 = dma.vmem_to_hbm [thread:$0]  %s233, 768, %s235, [#allocation4]
    $region29: #{tpu_custom_call.1} parent=1 // pred_fallthru
      _
    // Predicated region
    $region30: #{tpu_custom_call.1} parent=1 // pred_check
      _
    $region31: #{tpu_custom_call.1} parent=1 // pred_check_branch
      %239 = sbr.rel (0) target = $region33
    $region32: #{tpu_custom_call.1} parent=1 // pred_region
      %241 = dma.done [#allocation4], 768
    $region33: #{tpu_custom_call.1} parent=1 // pred_fallthru
      _
    %242 = vsyncpa [#allocation3], 1
    %243 = vsyncpa [#allocation6], 1
    %244 = vsyncpa [#allocation4], 1

</llo_original>
